<compile_context>
chip_gen: v7x
topology: tpu7x:2x2x1
jax: 0.10.0
libtpu: 0.0.40
codegen_flags: <defaults>
</compile_context>

<pallas_src>
import math
from functools import partial

import jax
import jax.numpy as jnp
from jax.experimental import pallas as pl
from jax.experimental.pallas import tpu as pltpu


def _linear_kernel(x_ref, w_ref, b_ref, o_ref):
    # x_ref: (M, K) f32 in VMEM   (M on the sublane axis, K tiny)
    # w_ref: (N, K) f32 in SMEM   (torch Linear weight layout, scalar reads)
    # b_ref: (N,)   f32 in SMEM
    # o_ref: (M, N) f32 in VMEM   (natural output layout — no transposes needed)
    K = x_ref.shape[1]
    N = o_ref.shape[1]
    x = x_ref[...]                          # single (padded) vreg load
    for n in range(N):                      # N == 2: static unroll, pure VPU work
        acc = w_ref[n, 0] * x[:, 0:1] + b_ref[n]   # bias folded into first FMA
        for k in range(1, K):               # K == 2
            acc = acc + w_ref[n, k] * x[:, k:k + 1]
        o_ref[:, n:n + 1] = acc


def pallas_linear(x2d, weight, bias):
    """Compute x2d @ weight.T + bias with a gridless VPU Pallas kernel."""
    M, K = x2d.shape
    N = weight.shape[0]
    return pl.pallas_call(
        _linear_kernel,
        out_shape=jax.ShapeDtypeStruct((M, N), x2d.dtype),
        in_specs=[
            pl.BlockSpec(memory_space=pltpu.MemorySpace.VMEM),   # x (M, K)
            pl.BlockSpec(memory_space=pltpu.MemorySpace.SMEM),   # weight (N, K)
            pl.BlockSpec(memory_space=pltpu.MemorySpace.SMEM),   # bias (N,)
        ],
        out_specs=pl.BlockSpec(memory_space=pltpu.MemorySpace.VMEM),
    )(x2d, weight, bias)


@jax.jit
def model_forward(x1, weight, bias):
    orig_shape = x1.shape
    K = orig_shape[-1]
    M = math.prod(orig_shape[:-1])
    N = weight.shape[0]

    x2d = x1.reshape(M, K)                  # zero-copy: x1 is contiguous
    out2d = pallas_linear(x2d, weight, bias)
    v1 = out2d.reshape(orig_shape[:-1] + (N,))

    # chunk(1, dim=-1)[0] is identity; squeeze(dim=-2) only removes size-1 dims.
    if v1.shape[-2] == 1:
        v1 = jnp.squeeze(v1, axis=-2)
    return v1


if __name__ == "__main__":
    key = jax.random.PRNGKey(0)
    k_x, k_w, k_b = jax.random.split(key, 3)

    # Input matching the module's expected shape.
    x1 = jax.random.uniform(k_x, (2, 2, 2, 2, 2, 2), dtype=jnp.float32)

    # Deterministic parameter init mimicking torch.nn.Linear(2, 2):
    # U(-1/sqrt(in_features), 1/sqrt(in_features))
    in_features, out_features = 2, 2
    bound = 1.0 / math.sqrt(in_features)
    weight = jax.random.uniform(
        k_w, (out_features, in_features), dtype=jnp.float32,
        minval=-bound, maxval=bound,
    )
    bias = jax.random.uniform(
        k_b, (out_features,), dtype=jnp.float32, minval=-bound, maxval=bound
    )

    out = model_forward(x1, weight, bias)
    out = jax.block_until_ready(out)

    # Sanity check against a pure-JAX reference.
    ref = jnp.einsum("...k,nk->...n", x1, weight) + bias
    assert out.shape == (2, 2, 2, 2, 2, 2), out.shape
    assert jnp.allclose(out, ref, atol=1e-5, rtol=1e-5)

    print("KERNEL_OK")
</pallas_src>

<mosaic_0001>
module attributes {stable_mosaic.version = 11 : i64} {
  func.func @_linear_kernel(%arg0: memref<32x2xf32, #tpu.memory_space<vmem>>, %arg1: memref<2x2xf32, #tpu.memory_space<smem>>, %arg2: memref<2xf32, #tpu.memory_space<smem>>, %arg3: memref<32x2xf32, #tpu.memory_space<vmem>>) attributes {dimension_semantics = [], scalar_prefetch = 0 : i64, scratch_operands = 0 : i64, tpu.core_type = #tpu.core_type<tc>} {
    %c0 = arith.constant 0 : index
    %c0_0 = arith.constant 0 : index
    %0 = vector.load %arg0[%c0, %c0_0] : memref<32x2xf32, #tpu.memory_space<vmem>>, vector<32x2xf32>
    %c0_1 = arith.constant 0 : index
    %c0_2 = arith.constant 0 : index
    %1 = memref.load %arg1[%c0_1, %c0_2] : memref<2x2xf32, #tpu.memory_space<smem>>
    %2 = vector.extract_strided_slice %0 {offsets = [0, 0], sizes = [32, 1], strides = [1, 1]} : vector<32x2xf32> to vector<32x1xf32>
    %3 = vector.broadcast %1 : f32 to vector<32x1xf32>
    %4 = arith.mulf %3, %2 : vector<32x1xf32>
    %c0_3 = arith.constant 0 : index
    %5 = memref.load %arg2[%c0_3] : memref<2xf32, #tpu.memory_space<smem>>
    %6 = vector.broadcast %5 : f32 to vector<32x1xf32>
    %7 = arith.addf %4, %6 : vector<32x1xf32>
    %c0_4 = arith.constant 0 : index
    %c1 = arith.constant 1 : index
    %8 = memref.load %arg1[%c0_4, %c1] : memref<2x2xf32, #tpu.memory_space<smem>>
    %9 = vector.extract_strided_slice %0 {offsets = [0, 1], sizes = [32, 1], strides = [1, 1]} : vector<32x2xf32> to vector<32x1xf32>
    %10 = vector.broadcast %8 : f32 to vector<32x1xf32>
    %11 = arith.mulf %10, %9 : vector<32x1xf32>
    %12 = arith.addf %7, %11 : vector<32x1xf32>
    %c0_5 = arith.constant 0 : index
    %c0_6 = arith.constant 0 : index
    %13 = vector.load %arg3[%c0_5, %c0_6] : memref<32x2xf32, #tpu.memory_space<vmem>>, vector<32x1xf32>
    tpu.vector_store %arg3[%c0_5, %c0_6], %12 {strides = array<i32>} : memref<32x2xf32, #tpu.memory_space<vmem>>, vector<32x1xf32>,
    %c1_7 = arith.constant 1 : index
    %c0_8 = arith.constant 0 : index
    %14 = memref.load %arg1[%c1_7, %c0_8] : memref<2x2xf32, #tpu.memory_space<smem>>
    %15 = vector.extract_strided_slice %0 {offsets = [0, 0], sizes = [32, 1], strides = [1, 1]} : vector<32x2xf32> to vector<32x1xf32>
    %16 = vector.broadcast %14 : f32 to vector<32x1xf32>
    %17 = arith.mulf %16, %15 : vector<32x1xf32>
    %c1_9 = arith.constant 1 : index
    %18 = memref.load %arg2[%c1_9] : memref<2xf32, #tpu.memory_space<smem>>
    %19 = vector.broadcast %18 : f32 to vector<32x1xf32>
    %20 = arith.addf %17, %19 : vector<32x1xf32>
    %c1_10 = arith.constant 1 : index
    %c1_11 = arith.constant 1 : index
    %21 = memref.load %arg1[%c1_10, %c1_11] : memref<2x2xf32, #tpu.memory_space<smem>>
    %22 = vector.extract_strided_slice %0 {offsets = [0, 1], sizes = [32, 1], strides = [1, 1]} : vector<32x2xf32> to vector<32x1xf32>
    %23 = vector.broadcast %21 : f32 to vector<32x1xf32>
    %24 = arith.mulf %23, %22 : vector<32x1xf32>
    %25 = arith.addf %20, %24 : vector<32x1xf32>
    %c0_12 = arith.constant 0 : index
    %c1_13 = arith.constant 1 : index
    %26 = vector.load %arg3[%c0_12, %c1_13] : memref<32x2xf32, #tpu.memory_space<vmem>>, vector<32x1xf32>
    tpu.vector_store %arg3[%c0_12, %c1_13], %25 {strides = array<i32>} : memref<32x2xf32, #tpu.memory_space<vmem>>, vector<32x1xf32>,
    return
  }
}

</mosaic_0001>

<llo_original>
// kernel: model_forward.1
$region0: #{model_forward.1}
  #allocation0 [shape = 'u32[]', space=smem, size = 0x4, offset = 0x4, fixed_abs, tag = 'smem constant byte address 0x4 - core index']
  #allocation1 [shape = 'u32[144,128]{1,0:T(1,128)}', space=vmem, size = 0x12000, scoped, tag = 'internal scratch']
  %s0 = inlined_call_operand.hbm [shape: f32[32,2], index: 0, kind: input, shape index: {}]
  %s1 = inlined_call_operand.vmem [shape: f32[2,2], index: 1, kind: input, shape index: {}]
  %s2 = inlined_call_operand.vmem [shape: f32[2], index: 2, kind: input, shape index: {}]
  %s3 = inlined_call_operand.hbm [shape: f32[32,2], index: 3, kind: output, shape index: {}]
  %s4 = sld [smem:[#allocation0]]
  $region34: #{model_forward.1} parent=0
    _
  %s6 = ssub.s32 1, %s4
  %s7 = scalar_select 0, %s6, %s4
  $region1: #{model_forward.1} parent=0
    #allocation2 [shape = 'u8[16384]{0}', space=vmem, size = 0x4000, scoped, tag = 'input window, operand 0, single buffered']
    #allocation3 [shape = 's32[1]{0}', space=sflag, size = 0x4, scoped, tag = 'scoped memory for model_forward.1']
    #allocation4 [shape = 's32[1]{0}', space=sflag, size = 0x4, scoped, tag = 'scoped memory for model_forward.1']
    #allocation5 [shape = 's32[1]{0}', space=sflag, size = 0x4, scoped, tag = 'scoped memory for model_forward.1']
    #allocation6 [shape = 'u8[1024]{0}', space=smem, size = 0x400, scoped, tag = 'input window, operand 1, single buffered']
    #allocation7 [shape = 'u8[512]{0}', space=smem, size = 0x200, scoped, tag = 'input window, operand 2, single buffered']
    #allocation8 [shape = 's32[1]{0}', space=sflag, size = 0x4, scoped, tag = 'scoped memory for model_forward.1']
    #allocation9 [shape = 'u8[16384]{0}', space=vmem, size = 0x4000, scoped, tag = 'output window, operand 0, single buffered']
    %8 = vsyncpa [#allocation3], 0
    %9 = vsyncpa [#allocation5], 0
    %10 = vsyncpa [#allocation8], 0
    %11 = vsyncpa [#allocation4], 0
    // Predicated region
    $region2: #{model_forward.1} parent=1 // pred_check
      _
    $region3: #{model_forward.1} parent=1 // pred_check_branch
      %13 = sbr.rel (0) target = $region5
    $region4: #{model_forward.1} parent=1 // pred_region
      %s15 = ssub.s32 512, 512
      %16 = vsyncadd [#allocation3], %s15
      %s17 = sshll.u32 [#allocation2], 4
      %s18 = int_to_ptr.vmem [resolvable:$true] %s17
      %23 = dma.hbm_to_vmem [thread:$0]  %s0, 512, %s18, [#allocation3], 128, 128, 8
    $region5: #{model_forward.1} parent=1 // pred_fallthru
      _
    // Predicated region
    $region6: #{model_forward.1} parent=1 // pred_check
      _
    $region7: #{model_forward.1} parent=1 // pred_check_branch
      %25 = sbr.rel (0) target = $region9
    $region8: #{model_forward.1} parent=1 // pred_region
      %s27 = ssub.s32 32, 32
      %28 = vsyncadd [#allocation5], %s27
      %s30 = sshll.u32 %s1, 4
      %s31 = int_to_ptr.vmem [resolvable:$true] %s30
      %33 = dma.vmem_to_smem %s31, 32, [#allocation6], [#allocation5]
    $region9: #{model_forward.1} parent=1 // pred_fallthru
      _
    // Predicated region
    $region10: #{model_forward.1} parent=1 // pred_check
      _
    $region11: #{model_forward.1} parent=1 // pred_check_branch
      %35 = sbr.rel (0) target = $region13
    $region12: #{model_forward.1} parent=1 // pred_region
      %s37 = ssub.s32 16, 16
      %38 = vsyncadd [#allocation8], %s37
      %s40 = sshll.u32 %s2, 4
      %s41 = int_to_ptr.vmem [resolvable:$true] %s40
      %43 = dma.vmem_to_smem %s41, 16, [#allocation7], [#allocation8]
    $region13: #{model_forward.1} parent=1 // pred_fallthru
      _
    // Predicated region
    $region14: #{model_forward.1} parent=1 // pred_check
      _
    $region15: #{model_forward.1} parent=1 // pred_check_branch
      %45 = sbr.rel (0) target = $region17
    $region16: #{model_forward.1} parent=1 // pred_region
      %46 = dma.done [#allocation3], 512
    $region17: #{model_forward.1} parent=1 // pred_fallthru
      _
    // Predicated region
    $region18: #{model_forward.1} parent=1 // pred_check
      _
    $region19: #{model_forward.1} parent=1 // pred_check_branch
      %48 = sbr.rel (0) target = $region21
    $region20: #{model_forward.1} parent=1 // pred_region
      %49 = dma.done [#allocation5], 32
    $region21: #{model_forward.1} parent=1 // pred_fallthru
      _
    // Predicated region
    $region22: #{model_forward.1} parent=1 // pred_check
      _
    $region23: #{model_forward.1} parent=1 // pred_check_branch
      %51 = sbr.rel (0) target = $region25
    $region24: #{model_forward.1} parent=1 // pred_region
      %52 = dma.done [#allocation8], 16
    $region25: #{model_forward.1} parent=1 // pred_fallthru
      _
    %53 = sfence
    %v54 = vld [vmem:[#allocation2] sm:$0xff]
    %v55 = vld [vmem:[#allocation2 + $0x8] sm:$0xff]
    %v56 = vld [vmem:[#allocation2 + $0x10] sm:$0xff]
    %v57 = vld [vmem:[#allocation2 + $0x18] sm:$0xff]
    %s58 = sld [smem:[#allocation6]]
    %v59 = vstv %s58
    %v60 = vmul.f32 %v59, %v54
    %v61 = vmul.f32 %v59, %v55
    %v62 = vmul.f32 %v59, %v56
    %v63 = vmul.f32 %v59, %v57
    %s64 = sld [smem:[#allocation7]]
    %v65 = vstv %s64
    %v66 = vadd.f32 %v60, %v65
    %v67 = vadd.f32 %v61, %v65
    %v68 = vadd.f32 %v62, %v65
    %v69 = vadd.f32 %v63, %v65
    %s70 = sld [smem:[#allocation6 + $0x1]]
    %v71 = vstv %s70
    %v72 = vmul.f32 %v71, %v54
    %v73 = vmul.f32 %v71, %v55
    %v74 = vmul.f32 %v71, %v56
    %v75 = vmul.f32 %v71, %v57
    %80 = vrot.lane.b32.xlu0 %v72, 127
    %v81 = vpop.permute.xlu0 %80
    %82 = vrot.lane.b32.xlu0 %v73, 127
    %v83 = vpop.permute.xlu0 %82
    %84 = vrot.lane.b32.xlu0 %v74, 127
    %v85 = vpop.permute.xlu0 %84
    %86 = vrot.lane.b32.xlu0 %v75, 127
    %v87 = vpop.permute.xlu0 %86
    %v92 = vadd.f32 %v66, %v81
    %v93 = vadd.f32 %v67, %v83
    %v94 = vadd.f32 %v68, %v85
    %v95 = vadd.f32 %v69, %v87
    %vm96 = vcmask 7168
    %97 = vst.msk [vmem:[#allocation9] sm:$0xff] %vm96, %v92
    %98 = vst.msk [vmem:[#allocation9 + $0x8] sm:$0xff] %vm96, %v93
    %99 = vst.msk [vmem:[#allocation9 + $0x10] sm:$0xff] %vm96, %v94
    %100 = vst.msk [vmem:[#allocation9 + $0x18] sm:$0xff] %vm96, %v95
    %s101 = sld [smem:[#allocation6 + $0x80]]
    %v102 = vstv %s101
    %v103 = vmul.f32 %v102, %v54
    %v104 = vmul.f32 %v102, %v55
    %v105 = vmul.f32 %v102, %v56
    %v106 = vmul.f32 %v102, %v57
    %s107 = sld [smem:[#allocation7 + $0x1]]
    %v108 = vstv %s107
    %v109 = vadd.f32 %v103, %v108
    %v110 = vadd.f32 %v104, %v108
    %v111 = vadd.f32 %v105, %v108
    %v112 = vadd.f32 %v106, %v108
    %s113 = sld [smem:[#allocation6 + $0x81]]
    %v114 = vstv %s113
    %v115 = vmul.f32 %v114, %v54
    %v116 = vmul.f32 %v114, %v55
    %v117 = vmul.f32 %v114, %v56
    %v118 = vmul.f32 %v114, %v57
    %123 = vrot.lane.b32.xlu0 %v115, 127
    %v124 = vpop.permute.xlu0 %123
    %125 = vrot.lane.b32.xlu0 %v116, 127
    %v126 = vpop.permute.xlu0 %125
    %127 = vrot.lane.b32.xlu0 %v117, 127
    %v128 = vpop.permute.xlu0 %127
    %129 = vrot.lane.b32.xlu0 %v118, 127
    %v130 = vpop.permute.xlu0 %129
    %v135 = vadd.f32 %v109, %v124
    %v136 = vadd.f32 %v110, %v126
    %v137 = vadd.f32 %v111, %v128
    %v138 = vadd.f32 %v112, %v130
    %143 = vrot.lane.b32.xlu0 %v135, 1
    %v144 = vpop.permute.xlu0 %143
    %145 = vrot.lane.b32.xlu0 %v136, 1
    %v146 = vpop.permute.xlu0 %145
    %147 = vrot.lane.b32.xlu0 %v137, 1
    %v148 = vpop.permute.xlu0 %147
    %149 = vrot.lane.b32.xlu0 %v138, 1
    %v150 = vpop.permute.xlu0 %149
    %vm155 = vcmask 15368
    %156 = vst.msk [vmem:[#allocation9] sm:$0xff] %vm155, %v144
    %157 = vst.msk [vmem:[#allocation9 + $0x8] sm:$0xff] %vm155, %v146
    %158 = vst.msk [vmem:[#allocation9 + $0x10] sm:$0xff] %vm155, %v148
    %159 = vst.msk [vmem:[#allocation9 + $0x18] sm:$0xff] %vm155, %v150
    // Predicated region
    $region26: #{model_forward.1} parent=1 // pred_check
      _
    $region27: #{model_forward.1} parent=1 // pred_check_branch
      %161 = sbr.rel (0) target = $region29
    $region28: #{model_forward.1} parent=1 // pred_region
      %s163 = ssub.s32 512, 512
      %164 = vsyncadd [#allocation4], %s163
      %s165 = sshll.u32 [#allocation9], 4
      %s166 = int_to_ptr.vmem [resolvable:$true] %s165
      %171 = dma.vmem_to_hbm [thread:$0]  %s166, 512, %s3, [#allocation4], 128, 128, 8
    $region29: #{model_forward.1} parent=1 // pred_fallthru
      _
    // Predicated region
    $region30: #{model_forward.1} parent=1 // pred_check
      _
    $region31: #{model_forward.1} parent=1 // pred_check_branch
      %173 = sbr.rel (0) target = $region33
    $region32: #{model_forward.1} parent=1 // pred_region
      %174 = dma.done [#allocation4], 512
    $region33: #{model_forward.1} parent=1 // pred_fallthru
      _
    %175 = vsyncpa [#allocation3], 1
    %176 = vsyncpa [#allocation4], 1
    %177 = vsyncpa [#allocation5], 1
    %178 = vsyncpa [#allocation8], 1

</llo_original>
